<compile_context>
chip_gen: v7x
topology: tpu7x:2x2x1
jax: 0.10.0
libtpu: 0.0.40
codegen_flags: <defaults>
</compile_context>

<pallas_src>
import functools

import jax
import jax.numpy as jnp
from jax.experimental import pallas as pl
from jax.experimental.pallas import tpu as pltpu


_TARGET_TILE_BYTES = 4 * 1024 * 1024        # per-input, per-buffer DMA tile
_LANE_CANDIDATES = (1024, 512, 256, 128)    # lane-dense widths (multiples of 128)


def _round_up(x, m):
    return ((x + m - 1) // m) * m


def _vae_loss_kernel(pred_ref, target_ref, mu_ref, logvar_ref, out_ref, acc_ref, *,
                     n_tiles, rows, tile_rows, recon_scale, kl_scale, recon_type):
    i = pl.program_id(0)

    @pl.when(i == 0)
    def _init():
        acc_ref[...] = jnp.zeros_like(acc_ref)

    def _accumulate(mask_rows):
        # In-kernel cast: load native dtype, compute diff in f32.
        diff = pred_ref[...].astype(jnp.float32) - target_ref[...].astype(jnp.float32)
        part = diff * diff if recon_type == 'mse' else jnp.abs(diff)
        if mask_rows:
            # Ragged last tile: zero out rows beyond the valid row count.
            row = jax.lax.broadcasted_iota(jnp.int32, part.shape, 0)
            part = jnp.where(row < rows - i * tile_rows, part, 0.0)
        lane = part.shape[-1]
        # (tile_rows, lane) -> (tile_rows//8, 8, lane): free leading-dim split;
        # the axis-0 reduce is pure VPU vreg adds (no cross-lane/XLU work in
        # the hot loop).
        part = part.reshape(tile_rows // 8, 8, lane)
        acc_ref[...] += jnp.sum(part, axis=0)

    if rows % tile_rows != 0:
        @pl.when(i < n_tiles - 1)
        def _full_tile():
            _accumulate(False)

        @pl.when(i == n_tiles - 1)
        def _ragged_tile():
            _accumulate(True)
    else:
        _accumulate(False)

    @pl.when(i == n_tiles - 1)
    def _finalize():
        # One cross-lane reduce for the whole reconstruction term.
        recon = recon_scale * jnp.sum(acc_ref[...])
        # KL computed exactly once: -0.5 * sum(1 + logvar - mu^2 - exp(logvar))
        mu = mu_ref[...].astype(jnp.float32)
        lv = logvar_ref[...].astype(jnp.float32)
        kl = -0.5 * jnp.sum(1.0 + lv - mu * mu - jnp.exp(lv))
        out_ref[...] = jnp.full(out_ref.shape, recon + kl_scale * kl, jnp.float32)


def vae_loss(pred, mu, logvar, target, *, recon_weight=100.0, kl_weight=1.0,
             reduction='mean', recon_type='mse', tile_rows_override=None):
    """Pallas implementation of VAELoss.forward with weight=None.

    pred/target: (B, C, H, W) (any shape), mu/logvar: (B, Z). Returns f32 scalar.
    """
    # TODO(synk): the `weight` mask path of mask_reduce_loss and reduction='none'
    # (non-scalar output) are not implemented; weight=None + 'mean'/'sum' is exact.
    assert pred.shape == target.shape
    assert reduction in ('mean', 'sum')
    assert recon_type in ('mse', 'l1')

    B = pred.shape[0]
    n_elem = int(pred.size)
    itemsize = int(jnp.dtype(pred.dtype).itemsize)
    sub = max(8, 32 // itemsize)   # sublane multiple for this dtype

    # Lane-dense 2-D view WITHOUT a padded HBM copy whenever possible: prefer
    # the widest lane count dividing n_elem that still yields >= 8 rows; else
    # the widest divisor; only jnp.pad if n_elem is not a multiple of 128.
    lane = 0
    for cand in _LANE_CANDIDATES:
        if n_elem % cand == 0 and n_elem // cand >= 8:
            lane = cand
            break
    if lane == 0:
        for cand in _LANE_CANDIDATES:
            if n_elem % cand == 0:
                lane = cand
                break
    if lane:
        rows = n_elem // lane
        pred2d = pred.reshape(rows, lane)        # free reshape, no HBM copy
        target2d = target.reshape(rows, lane)
    else:
        # Fallback (rare): innermost extent not a multiple of 128 -> pad.
        lane = 128
        rows = -(-n_elem // lane)
        pad = rows * lane - n_elem               # zeros: (0-0) adds nothing
        pred2d = jnp.pad(pred.reshape(-1), (0, pad)).reshape(rows, lane)
        target2d = jnp.pad(target.reshape(-1), (0, pad)).reshape(rows, lane)

    if tile_rows_override is not None:
        tile_rows = int(tile_rows_override)
        assert tile_rows % 8 == 0
    else:
        tile_rows = max(sub, (_TARGET_TILE_BYTES // (lane * itemsize)) // sub * sub)
    tile_rows = min(tile_rows, _round_up(rows, sub))
    n_tiles = -(-rows // tile_rows)

    mu2d = mu.reshape(B, -1)
    logvar2d = logvar.reshape(B, -1)

    if reduction == 'mean':
        recon_scale = float(recon_weight) / float(n_elem)
        kl_scale = float(kl_weight) / float(B)
    else:  # 'sum'
        recon_scale = float(recon_weight)
        kl_scale = float(kl_weight)

    kernel = functools.partial(
        _vae_loss_kernel,
        n_tiles=n_tiles,
        rows=rows,
        tile_rows=tile_rows,
        recon_scale=recon_scale,
        kl_scale=kl_scale,
        recon_type=recon_type,
    )

    cost = pl.CostEstimate(
        flops=3 * n_elem + 6 * int(mu.size),
        transcendentals=int(mu.size),
        bytes_accessed=(2 * n_elem * itemsize
                        + 2 * int(mu.size) * int(jnp.dtype(mu.dtype).itemsize)
                        + 8 * 128 * 4),
    )

    out = pl.pallas_call(
        kernel,
        out_shape=jax.ShapeDtypeStruct((8, 128), jnp.float32),
        grid_spec=pltpu.PrefetchScalarGridSpec(
            num_scalar_prefetch=0,
            grid=(n_tiles,),
            in_specs=[
                pl.BlockSpec((tile_rows, lane), lambda i: (i, 0)),
                pl.BlockSpec((tile_rows, lane), lambda i: (i, 0)),
                pl.BlockSpec(mu2d.shape, lambda i: (0, 0)),      # VMEM resident
                pl.BlockSpec(logvar2d.shape, lambda i: (0, 0)),  # VMEM resident
            ],
            out_specs=pl.BlockSpec((8, 128), lambda i: (0, 0)),
            scratch_shapes=[pltpu.VMEM((8, lane), jnp.float32)],
        ),
        compiler_params=pltpu.CompilerParams(
            dimension_semantics=("arbitrary",),
            vmem_limit_bytes=32 * 1024 * 1024),
        cost_estimate=cost,
    )(pred2d, target2d, mu2d, logvar2d)

    return out[0, 0]


def _vae_loss_ref(pred, mu, logvar, target, *, recon_weight=100.0,
                  kl_weight=1.0, reduction='mean', recon_type='mse'):
    """Plain-JAX reference mirroring the PyTorch semantics (weight=None)."""
    p = pred.astype(jnp.float32)
    t = target.astype(jnp.float32)
    per = (p - t) ** 2 if recon_type == 'mse' else jnp.abs(p - t)
    recon = jnp.mean(per) if reduction == 'mean' else jnp.sum(per)
    recon = recon_weight * recon
    m = mu.astype(jnp.float32)
    lv = logvar.astype(jnp.float32)
    kl = -0.5 * jnp.sum(1.0 + lv - m ** 2 - jnp.exp(lv))
    if reduction == 'mean':
        kl = kl / pred.shape[0]
    return recon + kl_weight * kl


if __name__ == "__main__":
    key = jax.random.PRNGKey(0)
    k1, k2, k3, k4, k5, k6 = jax.random.split(key, 6)

    # Primary case: B,C,H,W = 2,4,16,16 (no-pad, no-mask path).
    B, C, H, W = 2, 4, 16, 16
    Z = 32
    pred = jax.random.normal(k1, (B, C, H, W), dtype=jnp.float32)
    target = jax.random.normal(k2, (B, C, H, W), dtype=jnp.float32)
    mu = jax.random.normal(k3, (B, Z), dtype=jnp.float32) * 0.5
    logvar = jax.random.normal(k4, (B, Z), dtype=jnp.float32) * 0.1

    loss = vae_loss(pred, mu, logvar, target,
                    recon_weight=100.0, kl_weight=1.0, reduction='mean')
    loss = jax.block_until_ready(loss)
    ref = _vae_loss_ref(pred, mu, logvar, target,
                        recon_weight=100.0, kl_weight=1.0, reduction='mean')
    assert jnp.allclose(loss, ref, rtol=1e-5, atol=1e-5), (loss, ref)

    # L1 / sum variant on the same shapes.
    loss_l1 = vae_loss(pred, mu, logvar, target, recon_weight=100.0,
                       kl_weight=1.0, reduction='sum', recon_type='l1')
    loss_l1 = jax.block_until_ready(loss_l1)
    ref_l1 = _vae_loss_ref(pred, mu, logvar, target, recon_weight=100.0,
                           kl_weight=1.0, reduction='sum', recon_type='l1')
    assert jnp.allclose(loss_l1, ref_l1, rtol=1e-5, atol=1e-5), (loss_l1, ref_l1)

    # Ragged-rows case (exercises the in-kernel row mask on the last tile).
    pred_r = jax.random.normal(k5, (2, 4, 20, 16), dtype=jnp.float32)
    target_r = jax.random.normal(k6, (2, 4, 20, 16), dtype=jnp.float32)
    loss_r = vae_loss(pred_r, mu, logvar, target_r, recon_weight=100.0,
                      kl_weight=1.0, reduction='mean', tile_rows_override=8)
    loss_r = jax.block_until_ready(loss_r)
    ref_r = _vae_loss_ref(pred_r, mu, logvar, target_r,
                          recon_weight=100.0, kl_weight=1.0, reduction='mean')
    assert jnp.allclose(loss_r, ref_r, rtol=1e-5, atol=1e-5), (loss_r, ref_r)

    print("KERNEL_OK")
</pallas_src>

<mosaic_0001>
module attributes {stable_mosaic.version = 11 : i64} {
  func.func @_vae_loss_kernel(%arg0: i32, %arg1: memref<8x256xf32, #tpu.memory_space<vmem>>, %arg2: memref<8x256xf32, #tpu.memory_space<vmem>>, %arg3: memref<2x32xf32, #tpu.memory_space<vmem>>, %arg4: memref<2x32xf32, #tpu.memory_space<vmem>>, %arg5: memref<8x128xf32, #tpu.memory_space<vmem>>, %arg6: memref<8x256xf32, #tpu.memory_space<vmem>>) attributes {dimension_semantics = [#tpu.dimension_semantics<arbitrary>], iteration_bounds = array<i64: 1>, scalar_prefetch = 0 : i64, scratch_operands = 1 : i64, tpu.core_type = #tpu.core_type<tc>, window_params = [{transform_indices = @transform_0, window_bounds = array<i64: 8, 256>}, {transform_indices = @transform_1, window_bounds = array<i64: 8, 256>}, {pipeline_mode = #tpu.pipeline_mode<synchronous>, transform_indices = @transform_2, window_bounds = array<i64: 2, 32>}, {pipeline_mode = #tpu.pipeline_mode<synchronous>, transform_indices = @transform_3, window_bounds = array<i64: 2, 32>}, {pipeline_mode = #tpu.pipeline_mode<synchronous>, transform_indices = @transform_4, window_bounds = array<i64: 8, 128>}]} {
    %c0_i32 = arith.constant 0 : i32
    %0 = arith.cmpi eq, %arg0, %c0_i32 : i32
    %1 = arith.extui %0 : i1 to i32
    %c0_i32_0 = arith.constant 0 : i32
    %2 = arith.cmpi ne, %1, %c0_i32_0 : i32
    scf.if %2 {
      %cst_10 = arith.constant 0.000000e+00 : f32
      %15 = vector.broadcast %cst_10 : f32 to vector<8x256xf32>
      %c0_11 = arith.constant 0 : index
      %c0_12 = arith.constant 0 : index
      %16 = vector.load %arg6[%c0_11, %c0_12] : memref<8x256xf32, #tpu.memory_space<vmem>>, vector<8x256xf32>
      tpu.vector_store %arg6[%c0_11, %c0_12], %15 {strides = array<i32>} : memref<8x256xf32, #tpu.memory_space<vmem>>, vector<8x256xf32>,
    } else {
    }
    %c0 = arith.constant 0 : index
    %c0_1 = arith.constant 0 : index
    %3 = vector.load %arg1[%c0, %c0_1] : memref<8x256xf32, #tpu.memory_space<vmem>>, vector<8x256xf32>
    %c0_2 = arith.constant 0 : index
    %c0_3 = arith.constant 0 : index
    %4 = vector.load %arg2[%c0_2, %c0_3] : memref<8x256xf32, #tpu.memory_space<vmem>>, vector<8x256xf32>
    %5 = arith.subf %3, %4 : vector<8x256xf32>
    %6 = arith.mulf %5, %5 : vector<8x256xf32>
    %7 = vector.shape_cast %6 : vector<8x256xf32> to vector<1x8x256xf32>
    %c0_4 = arith.constant 0 : index
    %c0_5 = arith.constant 0 : index
    %8 = vector.load %arg6[%c0_4, %c0_5] : memref<8x256xf32, #tpu.memory_space<vmem>>, vector<8x256xf32>
    %cst = arith.constant dense<0.000000e+00> : vector<8x256xf32>
    %9 = vector.multi_reduction <add>, %7, %cst [0] : vector<1x8x256xf32> to vector<8x256xf32>
    %10 = arith.addf %8, %9 : vector<8x256xf32>
    %c0_6 = arith.constant 0 : index
    %c0_7 = arith.constant 0 : index
    %11 = vector.load %arg6[%c0_6, %c0_7] : memref<8x256xf32, #tpu.memory_space<vmem>>, vector<8x256xf32>
    tpu.vector_store %arg6[%c0_6, %c0_7], %10 {strides = array<i32>} : memref<8x256xf32, #tpu.memory_space<vmem>>, vector<8x256xf32>,
    %c0_i32_8 = arith.constant 0 : i32
    %12 = arith.cmpi eq, %arg0, %c0_i32_8 : i32
    %13 = arith.extui %12 : i1 to i32
    %c0_i32_9 = arith.constant 0 : i32
    %14 = arith.cmpi ne, %13, %c0_i32_9 : i32
    scf.if %14 {
      %c0_10 = arith.constant 0 : index
      %c0_11 = arith.constant 0 : index
      %15 = vector.load %arg6[%c0_10, %c0_11] : memref<8x256xf32, #tpu.memory_space<vmem>>, vector<8x256xf32>
      %16 = vector.shape_cast %15 : vector<8x256xf32> to vector<1x8x256xf32>
      %cst_12 = arith.constant dense<0.000000e+00> : vector<1xf32>
      %17 = vector.multi_reduction <add>, %16, %cst_12 [1, 2] : vector<1x8x256xf32> to vector<1xf32>
      %18 = vector.shape_cast %17 : vector<1xf32> to vector<1x1x1xf32>
      %19 = vector.extract %18[0, 0, 0] : f32 from vector<1x1x1xf32>
      %cst_13 = arith.constant 0.048828125 : f32
      %20 = arith.mulf %cst_13, %19 : f32
      %c0_14 = arith.constant 0 : index
      %c0_15 = arith.constant 0 : index
      %21 = vector.load %arg3[%c0_14, %c0_15] : memref<2x32xf32, #tpu.memory_space<vmem>>, vector<2x32xf32>
      %c0_16 = arith.constant 0 : index
      %c0_17 = arith.constant 0 : index
      %22 = vector.load %arg4[%c0_16, %c0_17] : memref<2x32xf32, #tpu.memory_space<vmem>>, vector<2x32xf32>
      %cst_18 = arith.constant 1.000000e+00 : f32
      %23 = vector.broadcast %cst_18 : f32 to vector<2x32xf32>
      %24 = arith.addf %23, %22 : vector<2x32xf32>
      %25 = arith.mulf %21, %21 : vector<2x32xf32>
      %26 = arith.subf %24, %25 : vector<2x32xf32>
      %27 = math.exp %22 : vector<2x32xf32>
      %28 = arith.subf %26, %27 : vector<2x32xf32>
      %29 = vector.shape_cast %28 : vector<2x32xf32> to vector<1x2x32xf32>
      %cst_19 = arith.constant dense<0.000000e+00> : vector<1xf32>
      %30 = vector.multi_reduction <add>, %29, %cst_19 [1, 2] : vector<1x2x32xf32> to vector<1xf32>
      %31 = vector.shape_cast %30 : vector<1xf32> to vector<1x1x1xf32>
      %32 = vector.extract %31[0, 0, 0] : f32 from vector<1x1x1xf32>
      %cst_20 = arith.constant -5.000000e-01 : f32
      %33 = arith.mulf %cst_20, %32 : f32
      %cst_21 = arith.constant 5.000000e-01 : f32
      %34 = arith.mulf %cst_21, %33 : f32
      %35 = arith.addf %20, %34 : f32
      %36 = vector.broadcast %35 : f32 to vector<8x128xf32>
      %c0_22 = arith.constant 0 : index
      %c0_23 = arith.constant 0 : index
      %37 = vector.load %arg5[%c0_22, %c0_23] : memref<8x128xf32, #tpu.memory_space<vmem>>, vector<8x128xf32>
      tpu.vector_store %arg5[%c0_22, %c0_23], %36 {strides = array<i32>} : memref<8x128xf32, #tpu.memory_space<vmem>>, vector<8x128xf32>,
    } else {
    }
    return
  }
  func.func @transform_0(%arg0: i32) -> (i32, i32) {
    %c0_i32 = arith.constant 0 : i32
    %c0_i32_0 = arith.constant 0 : i32
    return %arg0, %c0_i32 : i32, i32
  }
  func.func @transform_1(%arg0: i32) -> (i32, i32) {
    %c0_i32 = arith.constant 0 : i32
    %c0_i32_0 = arith.constant 0 : i32
    return %arg0, %c0_i32 : i32, i32
  }
  func.func @transform_2(%arg0: i32) -> (i32, i32) {
    %c0_i32 = arith.constant 0 : i32
    %c0_i32_0 = arith.constant 0 : i32
    %c0_i32_1 = arith.constant 0 : i32
    return %c0_i32, %c0_i32_0 : i32, i32
  }
  func.func @transform_3(%arg0: i32) -> (i32, i32) {
    %c0_i32 = arith.constant 0 : i32
    %c0_i32_0 = arith.constant 0 : i32
    %c0_i32_1 = arith.constant 0 : i32
    return %c0_i32, %c0_i32_0 : i32, i32
  }
  func.func @transform_4(%arg0: i32) -> (i32, i32) {
    %c0_i32 = arith.constant 0 : i32
    %c0_i32_0 = arith.constant 0 : i32
    %c0_i32_1 = arith.constant 0 : i32
    return %c0_i32, %c0_i32_0 : i32, i32
  }
}

</mosaic_0001>

<llo_original>
// kernel: tpu_custom_call.1
$region0: #{tpu_custom_call.1}
  #allocation0 [shape = 'u32[]', space=smem, size = 0x4, offset = 0x4, fixed_abs, tag = 'smem constant byte address 0x4 - core index']
  #allocation1 [shape = 'u32[144,128]{1,0:T(1,128)}', space=vmem, size = 0x12000, scoped, tag = 'internal scratch']
  #allocation2 [shape = 'f32[8,256]{1,0:T(8,128)}', space=vmem, size = 0x2000, scoped, tag = 'scratch operand']
  %s0 = inlined_call_operand.hbm [shape: f32[8,256], index: 0, kind: input, shape index: {}]
  %s1 = inlined_call_operand.hbm [shape: f32[8,256], index: 1, kind: input, shape index: {}]
  %s2 = inlined_call_operand.vmem [shape: f32[2,32], index: 2, kind: input, shape index: {}]
  %s3 = inlined_call_operand.vmem [shape: f32[2,32], index: 3, kind: input, shape index: {}]
  %s4 = inlined_call_operand.hbm [shape: f32[8,128], index: 4, kind: output, shape index: {}]
  %s5 = sld [smem:[#allocation0]]
  $region42: #{tpu_custom_call.1} parent=0
    _
  %s7 = ssub.s32 1, %s5
  %s8 = scalar_select 0, %s7, %s5
  $region1: #{tpu_custom_call.1} parent=0
    #allocation3 [shape = 'u8[8192]{0}', space=vmem, size = 0x2000, scoped, tag = 'input window, operand 0, single buffered']
    #allocation4 [shape = 's32[1]{0}', space=sflag, size = 0x4, scoped, tag = 'scoped memory for tpu_custom_call.1']
    #allocation5 [shape = 's32[1]{0}', space=sflag, size = 0x4, scoped, tag = 'scoped memory for tpu_custom_call.1']
    #allocation6 [shape = 'u8[8192]{0}', space=vmem, size = 0x2000, scoped, tag = 'input window, operand 1, single buffered']
    #allocation7 [shape = 's32[1]{0}', space=sflag, size = 0x4, scoped, tag = 'scoped memory for tpu_custom_call.1']
    #allocation8 [shape = 'u8[4096]{0}', space=vmem, size = 0x1000, scoped, tag = 'output window, operand 0, single buffered']
    %9 = vsyncpa [#allocation4], 0
    %10 = vsyncpa [#allocation7], 0
    %11 = vsyncpa [#allocation5], 0
    // Predicated region
    $region2: #{tpu_custom_call.1} parent=1 // pred_check
      _
    $region3: #{tpu_custom_call.1} parent=1 // pred_check_branch
      %13 = sbr.rel (0) target = $region5
    $region4: #{tpu_custom_call.1} parent=1 // pred_region
      %s15 = ssub.s32 256, 256
      %16 = vsyncadd [#allocation4], %s15
      %s18 = sshll.u32 [#allocation3], 4
      %s19 = int_to_ptr.vmem [resolvable:$true] %s18
      %21 = dma.hbm_to_vmem [thread:$0]  %s0, 256, %s19, [#allocation4]
    $region5: #{tpu_custom_call.1} parent=1 // pred_fallthru
      _
    // Predicated region
    $region6: #{tpu_custom_call.1} parent=1 // pred_check
      _
    $region7: #{tpu_custom_call.1} parent=1 // pred_check_branch
      %23 = sbr.rel (0) target = $region9
    $region8: #{tpu_custom_call.1} parent=1 // pred_region
      %s25 = ssub.s32 256, 256
      %26 = vsyncadd [#allocation7], %s25
      %s28 = sshll.u32 [#allocation6], 4
      %s29 = int_to_ptr.vmem [resolvable:$true] %s28
      %31 = dma.hbm_to_vmem [thread:$0]  %s1, 256, %s29, [#allocation7]
    $region9: #{tpu_custom_call.1} parent=1 // pred_fallthru
      _
    // Predicated region
    $region10: #{tpu_custom_call.1} parent=1 // pred_check
      _
    $region11: #{tpu_custom_call.1} parent=1 // pred_check_branch
      %33 = sbr.rel (0) target = $region13
    $region12: #{tpu_custom_call.1} parent=1 // pred_region
      _
    $region13: #{tpu_custom_call.1} parent=1 // pred_fallthru
      _
    // Predicated region
    $region14: #{tpu_custom_call.1} parent=1 // pred_check
      _
    $region15: #{tpu_custom_call.1} parent=1 // pred_check_branch
      %35 = sbr.rel (0) target = $region17
    $region16: #{tpu_custom_call.1} parent=1 // pred_region
      _
    $region17: #{tpu_custom_call.1} parent=1 // pred_fallthru
      _
    // Predicated region
    $region18: #{tpu_custom_call.1} parent=1 // pred_check
      _
    $region19: #{tpu_custom_call.1} parent=1 // pred_check_branch
      %37 = sbr.rel (0) target = $region21
    $region20: #{tpu_custom_call.1} parent=1 // pred_region
      %38 = dma.done [#allocation4], 256
    $region21: #{tpu_custom_call.1} parent=1 // pred_fallthru
      _
    // Predicated region
    $region22: #{tpu_custom_call.1} parent=1 // pred_check
      _
    $region23: #{tpu_custom_call.1} parent=1 // pred_check_branch
      %40 = sbr.rel (0) target = $region25
    $region24: #{tpu_custom_call.1} parent=1 // pred_region
      %41 = dma.done [#allocation7], 256
    $region25: #{tpu_custom_call.1} parent=1 // pred_fallthru
      _
    %p42 = scmp.eq.s32.totalorder 0, 0
    // Predicated region
    $region26: #{tpu_custom_call.1} parent=1 // pred_check
      %p43 = pneg %p42
    $region27: #{tpu_custom_call.1} parent=1 // pred_check_branch
      %45 = sbr.rel (%p43) target = $region29
    $region28: #{tpu_custom_call.1} parent=1 // pred_region
      %46 = vst [vmem:[#allocation2] sm:$0xff] 0.0
      %47 = vst [vmem:[#allocation2 + $0x8] sm:$0xff] 0.0
    $region29: #{tpu_custom_call.1} parent=1 // pred_fallthru
      _
    %v48 = vld [vmem:[#allocation3] sm:$0xff]
    %v49 = vld [vmem:[#allocation3 + $0x8] sm:$0xff]
    %v50 = vld [vmem:[#allocation6] sm:$0xff]
    %v51 = vld [vmem:[#allocation6 + $0x8] sm:$0xff]
    %v52 = vsub.f32 %v48, %v50
    %v53 = vsub.f32 %v49, %v51
    %v54 = vmul.f32 %v52, %v52
    %v55 = vmul.f32 %v53, %v53
    %v56 = vld [vmem:[#allocation2] sm:$0xff]
    %v57 = vld [vmem:[#allocation2 + $0x8] sm:$0xff]
    %v58 = vadd.f32 %v54, 0.0
    %v59 = vadd.f32 %v55, 0.0
    %v60 = vadd.f32 %v56, %v58
    %v61 = vadd.f32 %v57, %v59
    %62 = vst [vmem:[#allocation2] sm:$0xff] %v60
    %63 = vst [vmem:[#allocation2 + $0x8] sm:$0xff] %v61
    // Predicated region
    $region30: #{tpu_custom_call.1} parent=1 // pred_check
      %p64 = pneg %p42
    $region31: #{tpu_custom_call.1} parent=1 // pred_check_branch
      %66 = sbr.rel (%p64) target = $region33
    $region32: #{tpu_custom_call.1} parent=1 // pred_region
      %v67 = vld [vmem:[#allocation2] sm:$0xff]
      %v68 = vld [vmem:[#allocation2 + $0x8] sm:$0xff]
      %v69 = vadd.f32 %v67, %v68
      %70 = vadd.xlane.f32.xlu0 %v69
      %v71 = vpop.xlane.xlu0 %70
      %v72 = vrot.slane %v71, 4
      %v73 = vadd.f32 %v71, %v72
      %v74 = vrot.slane %v73, 2
      %v75 = vadd.f32 %v73, %v74
      %v76 = vrot.slane %v75, 1
      %v77 = vadd.f32 %v75, %v76
      %s78 = vtos %v77
      %s79 = smul.f32 %s78, 0.048828125
      %v80 = vld [vmem:[%s2] sm:$0x3]
      %v81 = vld [vmem:[%s3] sm:$0x3]
      %v82 = vadd.f32 %v81, 1.0
      %v83 = vmul.f32 %v80, %v80
      %v84 = vsub.f32 %v82, %v83
      %v85 = vmul.f32 %v81, 1.442695
      %v86 = vpow.pop %v85
      %v87 = vsub.f32 %v84, %v86
      %vm88 = vcmask 254976
      %v89 = vsel %vm88, %v87, 0.0
      %90 = vadd.xlane.f32.xlu0 %v89
      %v91 = vpop.xlane.xlu0 %90
      %v92 = vrot.slane %v91, 4
      %v93 = vadd.f32 %v91, %v92
      %v94 = vrot.slane %v93, 2
      %v95 = vadd.f32 %v93, %v94
      %v96 = vrot.slane %v95, 1
      %v97 = vadd.f32 %v95, %v96
      %s98 = vtos %v97
      %s99 = smul.f32 %s98, -0.5
      %s100 = smul.f32 %s99, 0.5
      %s101 = sadd.f32 %s79, %s100
      %v102 = vstv %s101
      %103 = vst [vmem:[#allocation8] sm:$0xff] %v102
    $region33: #{tpu_custom_call.1} parent=1 // pred_fallthru
      _
    // Predicated region
    $region34: #{tpu_custom_call.1} parent=1 // pred_check
      _
    $region35: #{tpu_custom_call.1} parent=1 // pred_check_branch
      %105 = sbr.rel (0) target = $region37
    $region36: #{tpu_custom_call.1} parent=1 // pred_region
      %s107 = ssub.s32 128, 128
      %108 = vsyncadd [#allocation5], %s107
      %s110 = sshll.u32 [#allocation8], 4
      %s111 = int_to_ptr.vmem [resolvable:$true] %s110
      %113 = dma.vmem_to_hbm [thread:$0]  %s111, 128, %s4, [#allocation5]
    $region37: #{tpu_custom_call.1} parent=1 // pred_fallthru
      _
    // Predicated region
    $region38: #{tpu_custom_call.1} parent=1 // pred_check
      _
    $region39: #{tpu_custom_call.1} parent=1 // pred_check_branch
      %115 = sbr.rel (0) target = $region41
    $region40: #{tpu_custom_call.1} parent=1 // pred_region
      %116 = dma.done [#allocation5], 128
    $region41: #{tpu_custom_call.1} parent=1 // pred_fallthru
      _
    %117 = vsyncpa [#allocation4], 1
    %118 = vsyncpa [#allocation7], 1
    %119 = vsyncpa [#allocation5], 1

</llo_original>
